<compile_context>
chip_gen: v7x
topology: tpu7x:2x2x1
jax: 0.10.0
libtpu: 0.0.40
codegen_flags: <defaults>
</compile_context>

<pallas_src>
import functools

import jax
import jax.numpy as jnp
from jax.experimental import pallas as pl
from jax.experimental.pallas import tpu as pltpu


def _causal_conv2d_kernel(x_ref, w_ref, o_ref, *, H, W, KH, KW, CIN,
                          dilation, padding_x):
    """One grid step, fully resident in VMEM.

    x_ref: (NB, Cin, H*W)            lane-dense flattened spatial axis.
    w_ref: (Cout, KH*KW*Cin + 1)     column (kh*KW + kw)*Cin + c == weight[o, c, kh, kw],
                                     last column == bias (folded into the matmul).
    o_ref: (NB, Cout, H*W)           lane-dense output (reshaped to NCHW by the wrapper).
    """
    HW = H * W
    NB = x_ref.shape[0]

    pad_left = padding_x * W + 1        # covers the most negative tap shift (dh=-padding_x, dw=-1)
    pad_right = max(KW - 2, 1)          # covers the dw=+1 tap at the last pixel

    wv = w_ref[...].astype(jnp.float32)  # (Cout, KH*KW*Cin + 1), used whole: no per-tap slicing

    # Hoisted column-validity masks for the horizontal taps (dw != 0).  The
    # causal/vertical shifts need no mask: the in-kernel zero halo covers them.
    col = jax.lax.broadcasted_iota(jnp.int32, (CIN, HW), 1) % W
    col_ok = {}
    for kw in range(KW):
        dw = kw - 1
        if dw != 0 and dw not in col_ok:
            col_ok[dw] = ((col + dw) >= 0) & ((col + dw) < W)

    zl = jnp.zeros((CIN, pad_left), jnp.float32)
    zr = jnp.zeros((CIN, pad_right), jnp.float32)
    ones_row = jnp.ones((1, HW), jnp.float32)

    # Build per-batch (KH*KW*Cin + 1, HW) patch stacks, then fold batch into lanes.
    stacks = []
    for b in range(NB):
        xb = x_ref[b].astype(jnp.float32)                       # (Cin, HW)
        xpad = jnp.concatenate([zl, xb, zr], axis=1)            # causal zero halo, in VMEM
        rows = []
        for kh in range(KH):
            dh = kh * dilation - padding_x                      # <= 0 (causal shift along H)
            for kw in range(KW):
                dw = kw - 1
                start = pad_left + dh * W + dw                  # static, >= 0 by construction
                p = xpad[:, start:start + HW]                   # (Cin, HW) shifted tap window
                if dw != 0:
                    p = jnp.where(col_ok[dw], p, 0.0)           # zero row-wrapped columns
                rows.append(p)
        rows.append(ones_row)                                   # bias row
        stacks.append(jnp.concatenate(rows, axis=0))            # (KH*KW*Cin + 1, HW)
    patch = stacks[0] if NB == 1 else jnp.concatenate(stacks, axis=1)   # (K+1, NB*HW)

    # Single MXU push: conv + bias fused; tap accumulation happens inside the
    # systolic array (K = KH*KW*Cin + 1), f32 accumulation.
    res = jnp.dot(wv, patch, preferred_element_type=jnp.float32)        # (Cout, NB*HW)
    res = jnp.maximum(res, 0.0)                                         # ReLU epilogue

    for b in range(NB):                                         # 256-lane-aligned slices
        o_ref[b] = res[:, b * HW:(b + 1) * HW].astype(o_ref.dtype)


def causal_conv2d(x_nchw, weight_oihw, bias, *, level=0, batch_per_step=None):
    """Pallas CausalConv2d forward. x_nchw: (N, Cin, H, W) -> (N, Cout, H, W)."""
    dilation = 2 ** level
    cout, cin, kh, kw = weight_oihw.shape
    padding_x = (kh - 1) * dilation
    n, c, h, w = x_nchw.shape
    assert c == cin
    hw = h * w

    if batch_per_step is None:
        batch_per_step = n             # one fat grid step (best on single-TC v5e/v6e)
    assert n % batch_per_step == 0
    num_steps = n // batch_per_step

    # Free, layout-preserving reshape; no pad / transpose launches on the data path.
    x_flat = jnp.reshape(x_nchw, (n, cin, hw))

    # Fused weight: (Cout, KH*KW*Cin + 1); column (kh*KW + kw)*Cin + c ==
    # weight[o, c, kh, kw]; the last column is the bias.
    w2 = jnp.transpose(weight_oihw, (0, 2, 3, 1)).reshape(cout, kh * kw * cin)
    w2 = jnp.concatenate([w2, bias.reshape(cout, 1)], axis=1)

    kernel = functools.partial(
        _causal_conv2d_kernel, H=h, W=w, KH=kh, KW=kw, CIN=cin,
        dilation=dilation, padding_x=padding_x)

    out_flat = pl.pallas_call(
        kernel,
        out_shape=jax.ShapeDtypeStruct((n, cout, hw), x_nchw.dtype),
        grid_spec=pltpu.PrefetchScalarGridSpec(
            num_scalar_prefetch=0,
            grid=(num_steps,),
            in_specs=[
                pl.BlockSpec((batch_per_step, cin, hw), lambda i: (i, 0, 0)),
                pl.BlockSpec((cout, kh * kw * cin + 1), lambda i: (0, 0)),
            ],
            out_specs=pl.BlockSpec((batch_per_step, cout, hw),
                                   lambda i: (i, 0, 0)),
        ),
        compiler_params=pltpu.CompilerParams(
            dimension_semantics=("parallel",)),
    )(x_flat, w2)

    # Free, layout-preserving reshape back to NCHW.
    return jnp.reshape(out_flat, (n, cout, h, w))


def _reference(x_nchw, weight_oihw, bias, *, level=0):
    """Plain-JAX reference matching the PyTorch module exactly."""
    dilation = 2 ** level
    kh = weight_oihw.shape[2]
    padding_x = (kh - 1) * dilation
    y = jax.lax.conv_general_dilated(
        x_nchw, weight_oihw,
        window_strides=(1, 1),
        padding=((padding_x, padding_x), (1, 1)),
        rhs_dilation=(dilation, 1),
        dimension_numbers=("NCHW", "OIHW", "NCHW"))
    y = y + bias[None, :, None, None]
    y = jnp.maximum(y, 0.0)
    return y[:, :, :-padding_x, :]


if __name__ == "__main__":
    # Module config: CausalConv2d(level=0, kernel_size_x=3, in_channels=4,
    #                             out_channels=32)
    level, kx, ky = 0, 3, 3
    in_channels, out_channels = 4, 32
    batch, height, width = 2, 16, 16

    key = jax.random.PRNGKey(0)
    kx_key, kw_key, kb_key = jax.random.split(key, 3)

    x = jax.random.normal(kx_key, (batch, in_channels, height, width),
                          dtype=jnp.float32)

    # Deterministic parameter init (same shapes/bound as nn.Conv2d's default).
    fan_in = in_channels * kx * ky
    bound = 1.0 / (fan_in ** 0.5)
    weight = jax.random.uniform(kw_key, (out_channels, in_channels, kx, ky),
                                dtype=jnp.float32, minval=-bound, maxval=bound)
    bias = jax.random.uniform(kb_key, (out_channels,),
                              dtype=jnp.float32, minval=-bound, maxval=bound)

    out = causal_conv2d(x, weight, bias, level=level)
    out = jax.block_until_ready(out)

    ref = _reference(x, weight, bias, level=level)
    assert out.shape == ref.shape == (batch, out_channels, height, width)
    # Tolerance accommodates MXU f32 rounding vs. the XLA conv reference.
    assert jnp.allclose(out, ref, atol=2e-3, rtol=2e-3)
    print("KERNEL_OK")
</pallas_src>

<mosaic_0001>
module attributes {stable_mosaic.version = 11 : i64} {
  func.func @_causal_conv2d_kernel(%arg0: i32, %arg1: memref<2x4x256xf32, #tpu.memory_space<vmem>>, %arg2: memref<32x37xf32, #tpu.memory_space<vmem>>, %arg3: memref<2x32x256xf32, #tpu.memory_space<vmem>>) attributes {dimension_semantics = [#tpu.dimension_semantics<parallel>], iteration_bounds = array<i64: 1>, scalar_prefetch = 0 : i64, scratch_operands = 0 : i64, tpu.core_type = #tpu.core_type<tc>, window_params = [{transform_indices = @transform_0, window_bounds = array<i64: 2, 4, 256>}, {pipeline_mode = #tpu.pipeline_mode<synchronous>, transform_indices = @transform_1, window_bounds = array<i64: 32, 37>}, {transform_indices = @transform_2, window_bounds = array<i64: 2, 32, 256>}]} {
    %c0 = arith.constant 0 : index
    %c0_0 = arith.constant 0 : index
    %0 = vector.load %arg2[%c0, %c0_0] : memref<32x37xf32, #tpu.memory_space<vmem>>, vector<32x37xf32>
    %1 = tpu.iota {dimensions = array<i32: 1>} : vector<4x256xi32>
    %c16_i32 = arith.constant 16 : i32
    %c0_i32 = arith.constant 0 : i32
    %2 = arith.cmpi eq, %c16_i32, %c0_i32 : i32
    %c1_i32 = arith.constant 1 : i32
    %3 = arith.select %2, %c1_i32, %c16_i32 : i32
    %4 = vector.broadcast %3 : i32 to vector<4x256xi32>
    %5 = arith.remsi %1, %4 : vector<4x256xi32>
    %c0_i32_1 = arith.constant 0 : i32
    %6 = vector.broadcast %c0_i32_1 : i32 to vector<4x256xi32>
    %7 = arith.cmpi ne, %5, %6 : vector<4x256xi32>
    %c0_i32_2 = arith.constant 0 : i32
    %8 = vector.broadcast %c0_i32_2 : i32 to vector<4x256xi32>
    %9 = arith.cmpi slt, %5, %8 : vector<4x256xi32>
    %c0_i32_3 = arith.constant 0 : i32
    %10 = arith.cmpi slt, %3, %c0_i32_3 : i32
    %11 = vector.broadcast %10 : i1 to vector<4x256xi1>
    %12 = vector.broadcast %11 : vector<4x256xi1> to vector<4x256xi1>
    %13 = arith.xori %9, %12 : vector<4x256xi1>
    %14 = arith.andi %13, %7 : vector<4x256xi1>
    %15 = vector.broadcast %3 : i32 to vector<4x256xi32>
    %16 = arith.addi %5, %15 : vector<4x256xi32>
    %17 = arith.select %14, %16, %5 : vector<4x256xi1>, vector<4x256xi32>
    %c-1_i32 = arith.constant -1 : i32
    %18 = vector.broadcast %c-1_i32 : i32 to vector<4x256xi32>
    %19 = arith.addi %17, %18 : vector<4x256xi32>
    %c0_i32_4 = arith.constant 0 : i32
    %20 = vector.broadcast %c0_i32_4 : i32 to vector<4x256xi32>
    %21 = arith.cmpi sge, %19, %20 : vector<4x256xi32>
    %c-1_i32_5 = arith.constant -1 : i32
    %22 = vector.broadcast %c-1_i32_5 : i32 to vector<4x256xi32>
    %23 = arith.addi %17, %22 : vector<4x256xi32>
    %c16_i32_6 = arith.constant 16 : i32
    %24 = vector.broadcast %c16_i32_6 : i32 to vector<4x256xi32>
    %25 = arith.cmpi slt, %23, %24 : vector<4x256xi32>
    %26 = arith.andi %21, %25 : vector<4x256xi1>
    %c1_i32_7 = arith.constant 1 : i32
    %27 = vector.broadcast %c1_i32_7 : i32 to vector<4x256xi32>
    %28 = arith.addi %17, %27 : vector<4x256xi32>
    %c0_i32_8 = arith.constant 0 : i32
    %29 = vector.broadcast %c0_i32_8 : i32 to vector<4x256xi32>
    %30 = arith.cmpi sge, %28, %29 : vector<4x256xi32>
    %c1_i32_9 = arith.constant 1 : i32
    %31 = vector.broadcast %c1_i32_9 : i32 to vector<4x256xi32>
    %32 = arith.addi %17, %31 : vector<4x256xi32>
    %c16_i32_10 = arith.constant 16 : i32
    %33 = vector.broadcast %c16_i32_10 : i32 to vector<4x256xi32>
    %34 = arith.cmpi slt, %32, %33 : vector<4x256xi32>
    %35 = arith.andi %30, %34 : vector<4x256xi1>
    %cst = arith.constant 0.000000e+00 : f32
    %36 = vector.broadcast %cst : f32 to vector<4x33xf32>
    %cst_11 = arith.constant 0.000000e+00 : f32
    %37 = vector.broadcast %cst_11 : f32 to vector<4x1xf32>
    %cst_12 = arith.constant 1.000000e+00 : f32
    %38 = vector.broadcast %cst_12 : f32 to vector<1x256xf32>
    %c0_13 = arith.constant 0 : index
    %c0_14 = arith.constant 0 : index
    %c0_15 = arith.constant 0 : index
    %39 = vector.load %arg1[%c0_13, %c0_14, %c0_15] : memref<2x4x256xf32, #tpu.memory_space<vmem>>, vector<1x4x256xf32>
    %40 = vector.shape_cast %39 : vector<1x4x256xf32> to vector<4x256xf32>
    %41 = tpu.concatenate %36, %40, %37 in 1 : vector<4x33xf32>, vector<4x256xf32>, vector<4x1xf32> -> vector<4x290xf32>
    %42 = vector.extract_strided_slice %41 {offsets = [0, 0], sizes = [4, 256], strides = [1, 1]} : vector<4x290xf32> to vector<4x256xf32>
    %cst_16 = arith.constant 0.000000e+00 : f32
    %43 = vector.broadcast %cst_16 : f32 to vector<4x256xf32>
    %44 = arith.select %26, %42, %43 : vector<4x256xi1>, vector<4x256xf32>
    %45 = vector.extract_strided_slice %41 {offsets = [0, 1], sizes = [4, 256], strides = [1, 1]} : vector<4x290xf32> to vector<4x256xf32>
    %46 = vector.extract_strided_slice %41 {offsets = [0, 2], sizes = [4, 256], strides = [1, 1]} : vector<4x290xf32> to vector<4x256xf32>
    %cst_17 = arith.constant 0.000000e+00 : f32
    %47 = vector.broadcast %cst_17 : f32 to vector<4x256xf32>
    %48 = arith.select %35, %46, %47 : vector<4x256xi1>, vector<4x256xf32>
    %49 = vector.extract_strided_slice %41 {offsets = [0, 16], sizes = [4, 256], strides = [1, 1]} : vector<4x290xf32> to vector<4x256xf32>
    %cst_18 = arith.constant 0.000000e+00 : f32
    %50 = vector.broadcast %cst_18 : f32 to vector<4x256xf32>
    %51 = arith.select %26, %49, %50 : vector<4x256xi1>, vector<4x256xf32>
    %52 = vector.extract_strided_slice %41 {offsets = [0, 17], sizes = [4, 256], strides = [1, 1]} : vector<4x290xf32> to vector<4x256xf32>
    %53 = vector.extract_strided_slice %41 {offsets = [0, 18], sizes = [4, 256], strides = [1, 1]} : vector<4x290xf32> to vector<4x256xf32>
    %cst_19 = arith.constant 0.000000e+00 : f32
    %54 = vector.broadcast %cst_19 : f32 to vector<4x256xf32>
    %55 = arith.select %35, %53, %54 : vector<4x256xi1>, vector<4x256xf32>
    %56 = vector.extract_strided_slice %41 {offsets = [0, 32], sizes = [4, 256], strides = [1, 1]} : vector<4x290xf32> to vector<4x256xf32>
    %cst_20 = arith.constant 0.000000e+00 : f32
    %57 = vector.broadcast %cst_20 : f32 to vector<4x256xf32>
    %58 = arith.select %26, %56, %57 : vector<4x256xi1>, vector<4x256xf32>
    %59 = vector.extract_strided_slice %41 {offsets = [0, 33], sizes = [4, 256], strides = [1, 1]} : vector<4x290xf32> to vector<4x256xf32>
    %60 = vector.extract_strided_slice %41 {offsets = [0, 34], sizes = [4, 256], strides = [1, 1]} : vector<4x290xf32> to vector<4x256xf32>
    %cst_21 = arith.constant 0.000000e+00 : f32
    %61 = vector.broadcast %cst_21 : f32 to vector<4x256xf32>
    %62 = arith.select %35, %60, %61 : vector<4x256xi1>, vector<4x256xf32>
    %63 = tpu.concatenate %44, %45, %48, %51, %52, %55, %58, %59, %62, %38 in 0 : vector<4x256xf32>, vector<4x256xf32>, vector<4x256xf32>, vector<4x256xf32>, vector<4x256xf32>, vector<4x256xf32>, vector<4x256xf32>, vector<4x256xf32>, vector<4x256xf32>, vector<1x256xf32> -> vector<37x256xf32>
    %c1 = arith.constant 1 : index
    %c0_22 = arith.constant 0 : index
    %c0_23 = arith.constant 0 : index
    %64 = vector.load %arg1[%c1, %c0_22, %c0_23] : memref<2x4x256xf32, #tpu.memory_space<vmem>>, vector<1x4x256xf32>
    %65 = vector.shape_cast %64 : vector<1x4x256xf32> to vector<4x256xf32>
    %66 = tpu.concatenate %36, %65, %37 in 1 : vector<4x33xf32>, vector<4x256xf32>, vector<4x1xf32> -> vector<4x290xf32>
    %67 = vector.extract_strided_slice %66 {offsets = [0, 0], sizes = [4, 256], strides = [1, 1]} : vector<4x290xf32> to vector<4x256xf32>
    %cst_24 = arith.constant 0.000000e+00 : f32
    %68 = vector.broadcast %cst_24 : f32 to vector<4x256xf32>
    %69 = arith.select %26, %67, %68 : vector<4x256xi1>, vector<4x256xf32>
    %70 = vector.extract_strided_slice %66 {offsets = [0, 1], sizes = [4, 256], strides = [1, 1]} : vector<4x290xf32> to vector<4x256xf32>
    %71 = vector.extract_strided_slice %66 {offsets = [0, 2], sizes = [4, 256], strides = [1, 1]} : vector<4x290xf32> to vector<4x256xf32>
    %cst_25 = arith.constant 0.000000e+00 : f32
    %72 = vector.broadcast %cst_25 : f32 to vector<4x256xf32>
    %73 = arith.select %35, %71, %72 : vector<4x256xi1>, vector<4x256xf32>
    %74 = vector.extract_strided_slice %66 {offsets = [0, 16], sizes = [4, 256], strides = [1, 1]} : vector<4x290xf32> to vector<4x256xf32>
    %cst_26 = arith.constant 0.000000e+00 : f32
    %75 = vector.broadcast %cst_26 : f32 to vector<4x256xf32>
    %76 = arith.select %26, %74, %75 : vector<4x256xi1>, vector<4x256xf32>
    %77 = vector.extract_strided_slice %66 {offsets = [0, 17], sizes = [4, 256], strides = [1, 1]} : vector<4x290xf32> to vector<4x256xf32>
    %78 = vector.extract_strided_slice %66 {offsets = [0, 18], sizes = [4, 256], strides = [1, 1]} : vector<4x290xf32> to vector<4x256xf32>
    %cst_27 = arith.constant 0.000000e+00 : f32
    %79 = vector.broadcast %cst_27 : f32 to vector<4x256xf32>
    %80 = arith.select %35, %78, %79 : vector<4x256xi1>, vector<4x256xf32>
    %81 = vector.extract_strided_slice %66 {offsets = [0, 32], sizes = [4, 256], strides = [1, 1]} : vector<4x290xf32> to vector<4x256xf32>
    %cst_28 = arith.constant 0.000000e+00 : f32
    %82 = vector.broadcast %cst_28 : f32 to vector<4x256xf32>
    %83 = arith.select %26, %81, %82 : vector<4x256xi1>, vector<4x256xf32>
    %84 = vector.extract_strided_slice %66 {offsets = [0, 33], sizes = [4, 256], strides = [1, 1]} : vector<4x290xf32> to vector<4x256xf32>
    %85 = vector.extract_strided_slice %66 {offsets = [0, 34], sizes = [4, 256], strides = [1, 1]} : vector<4x290xf32> to vector<4x256xf32>
    %cst_29 = arith.constant 0.000000e+00 : f32
    %86 = vector.broadcast %cst_29 : f32 to vector<4x256xf32>
    %87 = arith.select %35, %85, %86 : vector<4x256xi1>, vector<4x256xf32>
    %88 = tpu.concatenate %69, %70, %73, %76, %77, %80, %83, %84, %87, %38 in 0 : vector<4x256xf32>, vector<4x256xf32>, vector<4x256xf32>, vector<4x256xf32>, vector<4x256xf32>, vector<4x256xf32>, vector<4x256xf32>, vector<4x256xf32>, vector<4x256xf32>, vector<1x256xf32> -> vector<37x256xf32>
    %89 = tpu.concatenate %63, %88 in 1 : vector<37x256xf32>, vector<37x256xf32> -> vector<37x512xf32>
    %cst_30 = arith.constant dense<0.000000e+00> : vector<32x512xf32>
    %90 = tpu.matmul %0, %89, %cst_30 {dimension_numbers = #tpu.dot_dimension_numbers<[1], [0], [0], [1], [0, 0, 1, 1], [], []>} : vector<32x37xf32>, vector<37x512xf32>, vector<32x512xf32> -> vector<32x512xf32>
    %cst_31 = arith.constant 0.000000e+00 : f32
    %91 = vector.broadcast %cst_31 : f32 to vector<32x512xf32>
    %92 = arith.maximumf %90, %91 : vector<32x512xf32>
    %93 = vector.extract_strided_slice %92 {offsets = [0, 0], sizes = [32, 256], strides = [1, 1]} : vector<32x512xf32> to vector<32x256xf32>
    %c0_32 = arith.constant 0 : index
    %c0_33 = arith.constant 0 : index
    %c0_34 = arith.constant 0 : index
    %94 = vector.load %arg3[%c0_32, %c0_33, %c0_34] : memref<2x32x256xf32, #tpu.memory_space<vmem>>, vector<1x32x256xf32>
    %95 = vector.shape_cast %94 : vector<1x32x256xf32> to vector<32x256xf32>
    %96 = vector.shape_cast %93 : vector<32x256xf32> to vector<1x32x256xf32>
    tpu.vector_store %arg3[%c0_32, %c0_33, %c0_34], %96 {strides = array<i32>} : memref<2x32x256xf32, #tpu.memory_space<vmem>>, vector<1x32x256xf32>,
    %97 = vector.extract_strided_slice %92 {offsets = [0, 256], sizes = [32, 256], strides = [1, 1]} : vector<32x512xf32> to vector<32x256xf32>
    %c1_35 = arith.constant 1 : index
    %c0_36 = arith.constant 0 : index
    %c0_37 = arith.constant 0 : index
    %98 = vector.load %arg3[%c1_35, %c0_36, %c0_37] : memref<2x32x256xf32, #tpu.memory_space<vmem>>, vector<1x32x256xf32>
    %99 = vector.shape_cast %98 : vector<1x32x256xf32> to vector<32x256xf32>
    %100 = vector.shape_cast %97 : vector<32x256xf32> to vector<1x32x256xf32>
    tpu.vector_store %arg3[%c1_35, %c0_36, %c0_37], %100 {strides = array<i32>} : memref<2x32x256xf32, #tpu.memory_space<vmem>>, vector<1x32x256xf32>,
    return
  }
  func.func @transform_0(%arg0: i32) -> (i32, i32, i32) {
    %c0_i32 = arith.constant 0 : i32
    %c0_i32_0 = arith.constant 0 : i32
    %c0_i32_1 = arith.constant 0 : i32
    return %arg0, %c0_i32, %c0_i32_0 : i32, i32, i32
  }
  func.func @transform_1(%arg0: i32) -> (i32, i32) {
    %c0_i32 = arith.constant 0 : i32
    %c0_i32_0 = arith.constant 0 : i32
    %c0_i32_1 = arith.constant 0 : i32
    return %c0_i32, %c0_i32_0 : i32, i32
  }
  func.func @transform_2(%arg0: i32) -> (i32, i32, i32) {
    %c0_i32 = arith.constant 0 : i32
    %c0_i32_0 = arith.constant 0 : i32
    %c0_i32_1 = arith.constant 0 : i32
    return %arg0, %c0_i32, %c0_i32_0 : i32, i32, i32
  }
}

</mosaic_0001>

<llo_original>
// kernel: tpu_custom_call.1
$region0: #{tpu_custom_call.1}
  #allocation0 [shape = 'u32[]', space=smem, size = 0x4, offset = 0x4, fixed_abs, tag = 'smem constant byte address 0x4 - core index']
  #allocation1 [shape = 'u32[144,128]{1,0:T(1,128)}', space=vmem, size = 0x12000, scoped, tag = 'internal scratch']
  %s0 = inlined_call_operand.hbm [shape: f32[2,4,256], index: 0, kind: input, shape index: {}]
  %s1 = inlined_call_operand.hbm [shape: f32[32,37], index: 1, kind: input, shape index: {}]
  %s2 = inlined_call_operand.hbm [shape: f32[2,32,256], index: 2, kind: output, shape index: {}]
  %s3 = sld [smem:[#allocation0]]
  $region26: #{tpu_custom_call.1} parent=0
    _
  %s5 = ssub.s32 1, %s3
  %s6 = scalar_select 0, %s5, %s3
  $region1: #{tpu_custom_call.1} parent=0
    #allocation2 [shape = 'u8[8192]{0}', space=vmem, size = 0x2000, scoped, tag = 'input window, operand 0, single buffered']
    #allocation3 [shape = 's32[1]{0}', space=sflag, size = 0x4, scoped, tag = 'scoped memory for tpu_custom_call.1']
    #allocation4 [shape = 's32[1]{0}', space=sflag, size = 0x4, scoped, tag = 'scoped memory for tpu_custom_call.1']
    #allocation5 [shape = 'u8[16384]{0}', space=vmem, size = 0x4000, scoped, tag = 'input window, operand 1, single buffered']
    #allocation6 [shape = 's32[1]{0}', space=sflag, size = 0x4, scoped, tag = 'scoped memory for tpu_custom_call.1']
    #allocation7 [shape = 'u8[65536]{0}', space=vmem, size = 0x10000, scoped, tag = 'output window, operand 0, single buffered']
    %7 = vsyncpa [#allocation3], 0
    %8 = vsyncpa [#allocation6], 0
    %9 = vsyncpa [#allocation4], 0
    // Predicated region
    $region2: #{tpu_custom_call.1} parent=1 // pred_check
      _
    $region3: #{tpu_custom_call.1} parent=1 // pred_check_branch
      %11 = sbr.rel (0) target = $region5
    $region4: #{tpu_custom_call.1} parent=1 // pred_region
      %s13 = ssub.s32 256, 256
      %14 = vsyncadd [#allocation3], %s13
      %s15 = sshll.u32 [#allocation2], 4
      %s16 = int_to_ptr.vmem [resolvable:$true] %s15
      %21 = dma.hbm_to_vmem [thread:$0]  %s0, 256, %s16, [#allocation3], 128, 128, 8
    $region5: #{tpu_custom_call.1} parent=1 // pred_fallthru
      _
    // Predicated region
    $region6: #{tpu_custom_call.1} parent=1 // pred_check
      _
    $region7: #{tpu_custom_call.1} parent=1 // pred_check_branch
      %23 = sbr.rel (0) target = $region9
    $region8: #{tpu_custom_call.1} parent=1 // pred_region
      %s25 = ssub.s32 512, 512
      %26 = vsyncadd [#allocation6], %s25
      %s27 = sshll.u32 [#allocation5], 4
      %s28 = int_to_ptr.vmem [resolvable:$true] %s27
      %33 = dma.hbm_to_vmem [thread:$0]  %s1, 512, %s28, [#allocation6], 128, 128, 8
    $region9: #{tpu_custom_call.1} parent=1 // pred_fallthru
      _
    // Predicated region
    $region10: #{tpu_custom_call.1} parent=1 // pred_check
      _
    $region11: #{tpu_custom_call.1} parent=1 // pred_check_branch
      %35 = sbr.rel (0) target = $region13
    $region12: #{tpu_custom_call.1} parent=1 // pred_region
      %36 = dma.done [#allocation3], 256
    $region13: #{tpu_custom_call.1} parent=1 // pred_fallthru
      _
    // Predicated region
    $region14: #{tpu_custom_call.1} parent=1 // pred_check
      _
    $region15: #{tpu_custom_call.1} parent=1 // pred_check_branch
      %38 = sbr.rel (0) target = $region17
    $region16: #{tpu_custom_call.1} parent=1 // pred_region
      %39 = dma.done [#allocation6], 512
    $region17: #{tpu_custom_call.1} parent=1 // pred_fallthru
      _
    %v40 = vld [vmem:[#allocation5] sm:$0xff]
    %v41 = vld [vmem:[#allocation5 + $0x8] sm:$0xff]
    %v42 = vld [vmem:[#allocation5 + $0x10] sm:$0xff]
    %v43 = vld [vmem:[#allocation5 + $0x18] sm:$0xff]
    %v44 = vlaneseq
    %v45 = vand.u32 %v44, 127
    %v46 = vadd.s32 %v45, 128
    %vm47 = vcmp.lt.s32.totalorder %v45, 0
    %v48 = vsub.s32 0, %v45
    %v49 = vsel %vm47, %v48, %v45
    %v50 = vshrl.u32 %v49, 4
    %v51 = vand.u32 %v49, 15
    %v52 = vsub.s32 0, %v51
    %v53 = vsel %vm47, %v52, %v51
    %vm54 = vcmp.lt.s32.totalorder %v46, 0
    %v55 = vsub.s32 0, %v46
    %v56 = vsel %vm54, %v55, %v46
    %v57 = vshrl.u32 %v56, 4
    %v58 = vand.u32 %v56, 15
    %v59 = vsub.s32 0, %v58
    %v60 = vsel %vm54, %v59, %v58
    %vm61 = vcmp.ne.s32.totalorder %v53, 0
    %vm62 = vcmp.ne.s32.totalorder %v60, 0
    %vm63 = vcmp.lt.s32.totalorder %v53, 0
    %vm64 = vcmp.lt.s32.totalorder %v60, 0
    %vm65 = vmand %vm63, %vm61
    %vm66 = vmand %vm64, %vm62
    %v67 = vadd.s32 %v53, 16
    %v68 = vadd.s32 %v60, 16
    %v69 = vsel %vm65, %v67, %v53
    %v70 = vsel %vm66, %v68, %v60
    %v71 = vadd.s32 %v69, 4294967295
    %v72 = vadd.s32 %v70, 4294967295
    %vm73 = vcmp.ge.s32.totalorder %v71, 0
    %vm74 = vcmp.ge.s32.totalorder %v72, 0
    %vm75 = vcmp.lt.s32.totalorder %v71, 16
    %vm76 = vcmp.lt.s32.totalorder %v72, 16
    %vm77 = vmand %vm73, %vm75
    %vm78 = vmand %vm74, %vm76
    %v79 = vadd.s32 %v69, 1
    %v80 = vadd.s32 %v70, 1
    %vm81 = vcmp.ge.s32.totalorder %v79, 0
    %vm82 = vcmp.ge.s32.totalorder %v80, 0
    %vm83 = vcmp.lt.s32.totalorder %v79, 16
    %vm84 = vcmp.lt.s32.totalorder %v80, 16
    %vm85 = vmand %vm81, %vm83
    %vm86 = vmand %vm82, %vm84
    %v87 = vld [vmem:[#allocation2] sm:$0xff]
    %v89 = vcombine.high %v87, %v87
    %90 = vrot.lane.b32.xlu0 %v87, 33
    %v91 = vpop.permute.xlu0 %90
    %92 = vrot.lane.b32.xlu0 %v89, 33
    %v93 = vpop.permute.xlu0 %92
    %vm94 = vcmask 269312
    %v95 = vsel %vm94, %v91, %v93
    %v99 = vsel %vm94, 0.0, %v91
    %v100 = vsel %vm94, %v93, 0.0
    %v101 = vsel %vm77, %v99, 0.0
    %v102 = vsel %vm78, %v95, 0.0
    %105 = vrot.lane.b32.xlu0 %v99, 126
    %v106 = vpop.permute.xlu0 %105
    %107 = vrot.lane.b32.xlu0 %v95, 126
    %v108 = vpop.permute.xlu0 %107
    %109 = vrot.lane.b32.xlu0 %v100, 126
    %v110 = vpop.permute.xlu0 %109
    %vm111 = vcmask 1031168
    %v112 = vsel %vm111, %v106, %v108
    %v113 = vsel %vm111, %v108, %v110
    %v116 = vsel %vm85, %v112, 0.0
    %v117 = vsel %vm86, %v113, 0.0
    %118 = vrot.lane.b32.xlu0 %v99, 112
    %v119 = vpop.permute.xlu0 %118
    %120 = vrot.lane.b32.xlu0 %v95, 112
    %v121 = vpop.permute.xlu0 %120
    %122 = vrot.lane.b32.xlu0 %v100, 112
    %v123 = vpop.permute.xlu0 %122
    %vm124 = vcmask 916480
    %v125 = vsel %vm124, %v119, %v121
    %v126 = vsel %vm124, %v121, %v123
    %v129 = vsel %vm77, %v125, 0.0
    %v130 = vsel %vm78, %v126, 0.0
    %131 = vrot.lane.b32.xlu0 %v99, 110
    %v132 = vpop.permute.xlu0 %131
    %133 = vrot.lane.b32.xlu0 %v95, 110
    %v134 = vpop.permute.xlu0 %133
    %135 = vrot.lane.b32.xlu0 %v100, 110
    %v136 = vpop.permute.xlu0 %135
    %vm137 = vcmask 900096
    %v138 = vsel %vm137, %v132, %v134
    %v139 = vsel %vm137, %v134, %v136
    %v142 = vsel %vm85, %v138, 0.0
    %v143 = vsel %vm86, %v139, 0.0
    %144 = vrot.lane.b32.xlu0 %v99, 96
    %v145 = vpop.permute.xlu0 %144
    %146 = vrot.lane.b32.xlu0 %v95, 96
    %v147 = vpop.permute.xlu0 %146
    %148 = vrot.lane.b32.xlu0 %v100, 96
    %v149 = vpop.permute.xlu0 %148
    %vm150 = vcmask 785408
    %v151 = vsel %vm150, %v145, %v147
    %v152 = vsel %vm150, %v147, %v149
    %v155 = vsel %vm77, %v151, 0.0
    %v156 = vsel %vm78, %v152, 0.0
    %157 = vrot.lane.b32.xlu0 %v99, 94
    %v158 = vpop.permute.xlu0 %157
    %159 = vrot.lane.b32.xlu0 %v95, 94
    %v160 = vpop.permute.xlu0 %159
    %161 = vrot.lane.b32.xlu0 %v100, 94
    %v162 = vpop.permute.xlu0 %161
    %vm163 = vcmask 769024
    %v164 = vsel %vm163, %v158, %v160
    %v165 = vsel %vm163, %v160, %v162
    %v168 = vsel %vm85, %v164, 0.0
    %v169 = vsel %vm86, %v165, 0.0
    %v170 = vrot.slane %v99, 4
    %v171 = vrot.slane %v95, 4
    %v172 = vrot.slane %v100, 4
    %173 = vrot.lane.b32.xlu0 %v170, 127
    %v174 = vpop.permute.xlu0 %173
    %175 = vrot.lane.b32.xlu0 %v171, 127
    %v176 = vpop.permute.xlu0 %175
    %177 = vrot.lane.b32.xlu0 %v172, 127
    %v178 = vpop.permute.xlu0 %177
    %vm179 = vcmask 1039360
    %v180 = vsel %vm179, %v174, %v176
    %v181 = vsel %vm179, %v176, %v178
    %v186 = vrot.slane %v129, 4
    %v187 = vrot.slane %v130, 4
    %190 = vrot.lane.b32.xlu0 %v99, 111
    %v191 = vpop.permute.xlu0 %190
    %192 = vrot.lane.b32.xlu0 %v95, 111
    %v193 = vpop.permute.xlu0 %192
    %194 = vrot.lane.b32.xlu0 %v100, 111
    %v195 = vpop.permute.xlu0 %194
    %vm196 = vcmask 908288
    %v197 = vsel %vm196, %v191, %v193
    %v198 = vsel %vm196, %v193, %v195
    %v203 = vrot.slane %v142, 4
    %v204 = vrot.slane %v143, 4
    %207 = vrot.lane.b32.xlu0 %v170, 95
    %v208 = vpop.permute.xlu0 %207
    %209 = vrot.lane.b32.xlu0 %v171, 95
    %v210 = vpop.permute.xlu0 %209
    %211 = vrot.lane.b32.xlu0 %v172, 95
    %v212 = vpop.permute.xlu0 %211
    %vm213 = vcmask 777216
    %v214 = vsel %vm213, %v208, %v210
    %v215 = vsel %vm213, %v210, %v212
    %vm218 = vcmask 1043456
    %v219 = vsel %vm218, %v101, %v180
    %v220 = vsel %vm218, %v102, %v181
    %v221 = vsel %vm218, %v116, %v186
    %v222 = vsel %vm218, %v117, %v187
    %v223 = vsel %vm218, %v197, %v203
    %v224 = vsel %vm218, %v198, %v204
    %v225 = vsel %vm218, %v155, %v214
    %v226 = vsel %vm218, %v156, %v215
    %v227 = vsel %vm218, %v168, 1.0
    %v228 = vsel %vm218, %v169, 1.0
    %s229 = scalar_lea.vmem [#allocation2], 8
    %v230 = vld [vmem:[%s229] sm:$0xff]
    %v232 = vcombine.high %v230, %v230
    %233 = vrot.lane.b32.xlu0 %v230, 33
    %v234 = vpop.permute.xlu0 %233
    %235 = vrot.lane.b32.xlu0 %v232, 33
    %v236 = vpop.permute.xlu0 %235
    %v237 = vsel %vm94, %v234, %v236
    %v241 = vsel %vm94, 0.0, %v234
    %v242 = vsel %vm94, %v236, 0.0
    %v243 = vsel %vm77, %v241, 0.0
    %v244 = vsel %vm78, %v237, 0.0
    %247 = vrot.lane.b32.xlu0 %v241, 126
    %v248 = vpop.permute.xlu0 %247
    %249 = vrot.lane.b32.xlu0 %v237, 126
    %v250 = vpop.permute.xlu0 %249
    %251 = vrot.lane.b32.xlu0 %v242, 126
    %v252 = vpop.permute.xlu0 %251
    %v253 = vsel %vm111, %v248, %v250
    %v254 = vsel %vm111, %v250, %v252
    %v257 = vsel %vm85, %v253, 0.0
    %v258 = vsel %vm86, %v254, 0.0
    %259 = vrot.lane.b32.xlu0 %v241, 112
    %v260 = vpop.permute.xlu0 %259
    %261 = vrot.lane.b32.xlu0 %v237, 112
    %v262 = vpop.permute.xlu0 %261
    %263 = vrot.lane.b32.xlu0 %v242, 112
    %v264 = vpop.permute.xlu0 %263
    %v265 = vsel %vm124, %v260, %v262
    %v266 = vsel %vm124, %v262, %v264
    %v269 = vsel %vm77, %v265, 0.0
    %v270 = vsel %vm78, %v266, 0.0
    %271 = vrot.lane.b32.xlu0 %v241, 110
    %v272 = vpop.permute.xlu0 %271
    %273 = vrot.lane.b32.xlu0 %v237, 110
    %v274 = vpop.permute.xlu0 %273
    %275 = vrot.lane.b32.xlu0 %v242, 110
    %v276 = vpop.permute.xlu0 %275
    %v277 = vsel %vm137, %v272, %v274
    %v278 = vsel %vm137, %v274, %v276
    %v281 = vsel %vm85, %v277, 0.0
    %v282 = vsel %vm86, %v278, 0.0
    %283 = vrot.lane.b32.xlu0 %v241, 96
    %v284 = vpop.permute.xlu0 %283
    %285 = vrot.lane.b32.xlu0 %v237, 96
    %v286 = vpop.permute.xlu0 %285
    %287 = vrot.lane.b32.xlu0 %v242, 96
    %v288 = vpop.permute.xlu0 %287
    %v289 = vsel %vm150, %v284, %v286
    %v290 = vsel %vm150, %v286, %v288
    %v293 = vsel %vm77, %v289, 0.0
    %v294 = vsel %vm78, %v290, 0.0
    %295 = vrot.lane.b32.xlu0 %v241, 94
    %v296 = vpop.permute.xlu0 %295
    %297 = vrot.lane.b32.xlu0 %v237, 94
    %v298 = vpop.permute.xlu0 %297
    %299 = vrot.lane.b32.xlu0 %v242, 94
    %v300 = vpop.permute.xlu0 %299
    %v301 = vsel %vm163, %v296, %v298
    %v302 = vsel %vm163, %v298, %v300
    %v305 = vsel %vm85, %v301, 0.0
    %v306 = vsel %vm86, %v302, 0.0
    %v307 = vrot.slane %v241, 4
    %v308 = vrot.slane %v237, 4
    %v309 = vrot.slane %v242, 4
    %310 = vrot.lane.b32.xlu0 %v307, 127
    %v311 = vpop.permute.xlu0 %310
    %312 = vrot.lane.b32.xlu0 %v308, 127
    %v313 = vpop.permute.xlu0 %312
    %314 = vrot.lane.b32.xlu0 %v309, 127
    %v315 = vpop.permute.xlu0 %314
    %v316 = vsel %vm179, %v311, %v313
    %v317 = vsel %vm179, %v313, %v315
    %v322 = vrot.slane %v269, 4
    %v323 = vrot.slane %v270, 4
    %326 = vrot.lane.b32.xlu0 %v241, 111
    %v327 = vpop.permute.xlu0 %326
    %328 = vrot.lane.b32.xlu0 %v237, 111
    %v329 = vpop.permute.xlu0 %328
    %330 = vrot.lane.b32.xlu0 %v242, 111
    %v331 = vpop.permute.xlu0 %330
    %v332 = vsel %vm196, %v327, %v329
    %v333 = vsel %vm196, %v329, %v331
    %v338 = vrot.slane %v281, 4
    %v339 = vrot.slane %v282, 4
    %342 = vrot.lane.b32.xlu0 %v307, 95
    %v343 = vpop.permute.xlu0 %342
    %344 = vrot.lane.b32.xlu0 %v308, 95
    %v345 = vpop.permute.xlu0 %344
    %346 = vrot.lane.b32.xlu0 %v309, 95
    %v347 = vpop.permute.xlu0 %346
    %v348 = vsel %vm213, %v343, %v345
    %v349 = vsel %vm213, %v345, %v347
    %v352 = vsel %vm218, %v243, %v316
    %v353 = vsel %vm218, %v244, %v317
    %v354 = vsel %vm218, %v257, %v322
    %v355 = vsel %vm218, %v258, %v323
    %v356 = vsel %vm218, %v332, %v338
    %v357 = vsel %vm218, %v333, %v339
    %v358 = vsel %vm218, %v293, %v348
    %v359 = vsel %vm218, %v294, %v349
    %v360 = vsel %vm218, %v305, 1.0
    %v361 = vsel %vm218, %v306, 1.0
    %vm362 = vcmask 302080
    %v364 = vsel %vm362, %v40, 0
    %v367 = vsel %vm362, %v41, 0
    %v370 = vsel %vm362, %v42, 0
    %v373 = vsel %vm362, %v43, 0
    %vm375 = vcmask 1044480
    %v377 = vsel %vm375, %v227, 0
    %v380 = vsel %vm375, %v228, 0
    %v383 = vsel %vm375, %v360, 0
    %v386 = vsel %vm375, %v361, 0
    %388 = vmatprep.subr.mxu0 %v220
    %389 = vmatpush1.msra.mxu0 %v219
    %390 = vmatprep.subr.mxu0 %v222
    %391 = vmatpush1.msra.mxu0 %v221
    %392 = vmatprep.subr.mxu0 %v224
    %393 = vmatpush1.msra.mxu0 %v223
    %394 = vmatprep.subr.mxu0 %v226
    %395 = vmatpush1.msra.mxu0 %v225
    %396 = vmatprep.subr.mxu0 %v380
    %397 = vmatpush1.msra.mxu0 %v377
    %398 = vmatprep.subr.mxu0 0.0
    %399 = vmatpush1.msra.mxu0 0.0
    %400 = vmatprep.subr.mxu0 0.0
    %401 = vmatpush1.msra.mxu0 0.0
    %402 = vmatprep.subr.mxu0 0.0
    %403 = vmatpush1.msra.mxu0 0.0
    %404 = vmatprep.subr.mxu0 0.0
    %405 = vmatpush1.msra.mxu0 0.0
    %406 = vmatprep.subr.mxu0 0.0
    %407 = vmatpush1.msra.mxu0 0.0
    %408 = vmatprep.subr.mxu0 0.0
    %409 = vmatpush1.msra.mxu0 0.0
    %410 = vmatprep.subr.mxu0 0.0
    %411 = vmatpush1.msra.mxu0 0.0
    %412 = vmatprep.subr.mxu0 0.0
    %413 = vmatpush1.msra.mxu0 0.0
    %414 = vmatprep.subr.mxu0 0.0
    %415 = vmatpush1.msra.mxu0 0.0
    %416 = vmatprep.subr.mxu0 0.0
    %417 = vmatpush1.msra.mxu0 0.0
    %418 = vmatprep.subr.mxu0 0.0
    %419 = vmatpush1.msra.mxu0 0.0
    %420 = vmatprep.subr.mxu0 0.0
    %421 = vmatpush1.msra.mxu0 0.0
    %422 = vmatprep.subr.mxu0 0.0
    %423 = vmatpush1.msra.mxu0 0.0
    %424 = vmatprep.subr.mxu0 0.0
    %425 = vmatpush1.msra.mxu0 0.0
    %426 = vmatprep.subr.mxu0 0.0
    %427 = vmatpush1.msra.mxu0 0.0
    %428 = vmatprep.subr.mxu0 0.0
    %429 = vmatpush1.msra.mxu0 0.0
    %430 = vmatprep.subr.mxu0 0.0
    %431 = vmatpush1.msra.mxu0 0.0
    %432 = vmatprep.subr.mxu0 0.0
    %433 = vmatpush1.msra.mxu0 0.0
    %434 = vmatprep.subr.mxu0 0.0
    %435 = vmatpush1.msra.mxu0 0.0
    %436 = vmatprep.subr.mxu0 0.0
    %437 = vmatpush1.msra.mxu0 0.0
    %438 = vmatprep.subr.mxu0 0.0
    %439 = vmatpush1.msra.mxu0 0.0
    %440 = vmatprep.subr.mxu0 0.0
    %441 = vmatpush1.msra.mxu0 0.0
    %442 = vmatprep.subr.mxu0 0.0
    %443 = vmatpush1.msra.mxu0 0.0
    %444 = vmatprep.subr.mxu0 0.0
    %445 = vmatpush1.msra.mxu0 0.0
    %446 = vmatprep.subr.mxu0 0.0
    %447 = vmatpush1.msra.mxu0 0.0
    %448 = vmatprep.subr.mxu0 0.0
    %449 = vmatpush1.msra.mxu0 0.0
    %450 = vmatprep.subr.mxu0 0.0
    %451 = vmatpush1.msra.mxu0 0.0
    %452 = vmatprep.mubr.f32.mxu0 0.0
    %453 = vmatmul.mubr.f32.gmra.mrb[0].mxu0 %v364
    %v454 = vpop.f32.mrb[0].mxu0
    %v455 = vadd.f32 0.0, %v454
    %v456 = vpop.f32.mrb[0].mxu0
    %v457 = vadd.f32 0.0, %v456
    %458 = vmatprep.mubr.f32.mxu0 0.0
    %459 = vmatmul.mubr.f32.gmra.mrb[0].mxu0 %v367
    %v460 = vpop.f32.mrb[0].mxu0
    %v461 = vadd.f32 0.0, %v460
    %v462 = vpop.f32.mrb[0].mxu0
    %v463 = vadd.f32 0.0, %v462
    %464 = vmatprep.mubr.f32.mxu0 0.0
    %465 = vmatmul.mubr.f32.gmra.mrb[0].mxu0 %v370
    %v466 = vpop.f32.mrb[0].mxu0
    %v467 = vadd.f32 0.0, %v466
    %v468 = vpop.f32.mrb[0].mxu0
    %v469 = vadd.f32 0.0, %v468
    %470 = vmatprep.mubr.f32.mxu0 0.0
    %471 = vmatmul.mubr.f32.gmra.mrb[0].mxu0 %v373
    %v472 = vpop.f32.mrb[0].mxu0
    %v473 = vadd.f32 0.0, %v472
    %v474 = vpop.f32.mrb[0].mxu0
    %v475 = vadd.f32 0.0, %v474
    %476 = vdwg.mxu0
    %477 = vmatprep.subr.mxu0 %v353
    %478 = vmatpush1.msra.mxu0 %v352
    %479 = vmatprep.subr.mxu0 %v355
    %480 = vmatpush1.msra.mxu0 %v354
    %481 = vmatprep.subr.mxu0 %v357
    %482 = vmatpush1.msra.mxu0 %v356
    %483 = vmatprep.subr.mxu0 %v359
    %484 = vmatpush1.msra.mxu0 %v358
    %485 = vmatprep.subr.mxu0 %v386
    %486 = vmatpush1.msra.mxu0 %v383
    %487 = vmatprep.subr.mxu0 0.0
    %488 = vmatpush1.msra.mxu0 0.0
    %489 = vmatprep.subr.mxu0 0.0
    %490 = vmatpush1.msra.mxu0 0.0
    %491 = vmatprep.subr.mxu0 0.0
    %492 = vmatpush1.msra.mxu0 0.0
    %493 = vmatprep.subr.mxu0 0.0
    %494 = vmatpush1.msra.mxu0 0.0
    %495 = vmatprep.subr.mxu0 0.0
    %496 = vmatpush1.msra.mxu0 0.0
    %497 = vmatprep.subr.mxu0 0.0
    %498 = vmatpush1.msra.mxu0 0.0
    %499 = vmatprep.subr.mxu0 0.0
    %500 = vmatpush1.msra.mxu0 0.0
    %501 = vmatprep.subr.mxu0 0.0
    %502 = vmatpush1.msra.mxu0 0.0
    %503 = vmatprep.subr.mxu0 0.0
    %504 = vmatpush1.msra.mxu0 0.0
    %505 = vmatprep.subr.mxu0 0.0
    %506 = vmatpush1.msra.mxu0 0.0
    %507 = vmatprep.subr.mxu0 0.0
    %508 = vmatpush1.msra.mxu0 0.0
    %509 = vmatprep.subr.mxu0 0.0
    %510 = vmatpush1.msra.mxu0 0.0
    %511 = vmatprep.subr.mxu0 0.0
    %512 = vmatpush1.msra.mxu0 0.0
    %513 = vmatprep.subr.mxu0 0.0
    %514 = vmatpush1.msra.mxu0 0.0
    %515 = vmatprep.subr.mxu0 0.0
    %516 = vmatpush1.msra.mxu0 0.0
    %517 = vmatprep.subr.mxu0 0.0
    %518 = vmatpush1.msra.mxu0 0.0
    %519 = vmatprep.subr.mxu0 0.0
    %520 = vmatpush1.msra.mxu0 0.0
    %521 = vmatprep.subr.mxu0 0.0
    %522 = vmatpush1.msra.mxu0 0.0
    %523 = vmatprep.subr.mxu0 0.0
    %524 = vmatpush1.msra.mxu0 0.0
    %525 = vmatprep.subr.mxu0 0.0
    %526 = vmatpush1.msra.mxu0 0.0
    %527 = vmatprep.subr.mxu0 0.0
    %528 = vmatpush1.msra.mxu0 0.0
    %529 = vmatprep.subr.mxu0 0.0
    %530 = vmatpush1.msra.mxu0 0.0
    %531 = vmatprep.subr.mxu0 0.0
    %532 = vmatpush1.msra.mxu0 0.0
    %533 = vmatprep.subr.mxu0 0.0
    %534 = vmatpush1.msra.mxu0 0.0
    %535 = vmatprep.subr.mxu0 0.0
    %536 = vmatpush1.msra.mxu0 0.0
    %537 = vmatprep.subr.mxu0 0.0
    %538 = vmatpush1.msra.mxu0 0.0
    %539 = vmatprep.subr.mxu0 0.0
    %540 = vmatpush1.msra.mxu0 0.0
    %541 = vmatprep.mubr.f32.mxu0 0.0
    %542 = vmatmul.mubr.f32.gmra.mrb[0].mxu0 %v364
    %v543 = vpop.f32.mrb[0].mxu0
    %v544 = vadd.f32 0.0, %v543
    %v545 = vpop.f32.mrb[0].mxu0
    %v546 = vadd.f32 0.0, %v545
    %547 = vmatprep.mubr.f32.mxu0 0.0
    %548 = vmatmul.mubr.f32.gmra.mrb[0].mxu0 %v367
    %v549 = vpop.f32.mrb[0].mxu0
    %v550 = vadd.f32 0.0, %v549
    %v551 = vpop.f32.mrb[0].mxu0
    %v552 = vadd.f32 0.0, %v551
    %553 = vmatprep.mubr.f32.mxu0 0.0
    %554 = vmatmul.mubr.f32.gmra.mrb[0].mxu0 %v370
    %v555 = vpop.f32.mrb[0].mxu0
    %v556 = vadd.f32 0.0, %v555
    %v557 = vpop.f32.mrb[0].mxu0
    %v558 = vadd.f32 0.0, %v557
    %559 = vmatprep.mubr.f32.mxu0 0.0
    %560 = vmatmul.mubr.f32.gmra.mrb[0].mxu0 %v373
    %v561 = vpop.f32.mrb[0].mxu0
    %v562 = vadd.f32 0.0, %v561
    %v563 = vpop.f32.mrb[0].mxu0
    %v564 = vadd.f32 0.0, %v563
    %565 = vdwg.mxu0
    %v566 = vmax.f32 %v455, 0.0
    %v567 = vmax.f32 %v457, 0.0
    %v568 = vmax.f32 %v544, 0.0
    %v569 = vmax.f32 %v546, 0.0
    %v570 = vmax.f32 %v461, 0.0
    %v571 = vmax.f32 %v463, 0.0
    %v572 = vmax.f32 %v550, 0.0
    %v573 = vmax.f32 %v552, 0.0
    %v574 = vmax.f32 %v467, 0.0
    %v575 = vmax.f32 %v469, 0.0
    %v576 = vmax.f32 %v556, 0.0
    %v577 = vmax.f32 %v558, 0.0
    %v578 = vmax.f32 %v473, 0.0
    %v579 = vmax.f32 %v475, 0.0
    %v580 = vmax.f32 %v562, 0.0
    %v581 = vmax.f32 %v564, 0.0
    %582 = vst [vmem:[#allocation7] sm:$0xff] %v566
    %583 = vst [vmem:[#allocation7 + $0x8] sm:$0xff] %v567
    %584 = vst [vmem:[#allocation7 + $0x10] sm:$0xff] %v570
    %585 = vst [vmem:[#allocation7 + $0x18] sm:$0xff] %v571
    %586 = vst [vmem:[#allocation7 + $0x20] sm:$0xff] %v574
    %587 = vst [vmem:[#allocation7 + $0x28] sm:$0xff] %v575
    %588 = vst [vmem:[#allocation7 + $0x30] sm:$0xff] %v578
    %589 = vst [vmem:[#allocation7 + $0x38] sm:$0xff] %v579
    %s590 = scalar_lea.vmem [#allocation7], 64
    %591 = vst [vmem:[%s590] sm:$0xff] %v568
    %592 = vst [vmem:[%s590 + $0x8] sm:$0xff] %v569
    %593 = vst [vmem:[%s590 + $0x10] sm:$0xff] %v572
    %594 = vst [vmem:[%s590 + $0x18] sm:$0xff] %v573
    %595 = vst [vmem:[%s590 + $0x20] sm:$0xff] %v576
    %596 = vst [vmem:[%s590 + $0x28] sm:$0xff] %v577
    %597 = vst [vmem:[%s590 + $0x30] sm:$0xff] %v580
    %598 = vst [vmem:[%s590 + $0x38] sm:$0xff] %v581
    // Predicated region
    $region18: #{tpu_custom_call.1} parent=1 // pred_check
      _
    $region19: #{tpu_custom_call.1} parent=1 // pred_check_branch
      %600 = sbr.rel (0) target = $region21
    $region20: #{tpu_custom_call.1} parent=1 // pred_region
      %s602 = ssub.s32 2048, 2048
      %603 = vsyncadd [#allocation4], %s602
      %s604 = sshll.u32 [#allocation7], 4
      %s605 = int_to_ptr.vmem [resolvable:$true] %s604
      %610 = dma.vmem_to_hbm [thread:$0]  %s605, 2048, %s2, [#allocation4], 256, 256, 16
    $region21: #{tpu_custom_call.1} parent=1 // pred_fallthru
      _
    // Predicated region
    $region22: #{tpu_custom_call.1} parent=1 // pred_check
      _
    $region23: #{tpu_custom_call.1} parent=1 // pred_check_branch
      %612 = sbr.rel (0) target = $region25
    $region24: #{tpu_custom_call.1} parent=1 // pred_region
      %613 = dma.done [#allocation4], 2048
    $region25: #{tpu_custom_call.1} parent=1 // pred_fallthru
      _
    %614 = vsyncpa [#allocation3], 1
    %615 = vsyncpa [#allocation6], 1
    %616 = vsyncpa [#allocation4], 1

</llo_original>
